<compile_context>
chip_gen: v6e
topology: v6e:2x2x1
jax: 0.10.0
libtpu: 0.0.40
codegen_flags: <defaults>
</compile_context>

<pallas_src>
from functools import partial

import jax
import jax.numpy as jnp
from jax.experimental import pallas as pl
from jax.experimental.pallas import tpu as pltpu

EPS = 1e-5
LANE = 128
# 48 MiB: below v7x's 64 MiB physical VMEM (with headroom), well under v5e/v6e's 128 MiB,
# and above the 32 MiB scoped default so larger resident weights still fit.
VMEM_LIMIT = 48 << 20


def _round_up(x, m):
    return (x + m - 1) // m * m


# ---------------------------------------------------------------------------
# Pass 1: conv tile (MXU matmul) -> per-tile partial BN statistics only.
# ---------------------------------------------------------------------------
def conv_stats_kernel(p_ref, w_ref, stats_ref):
    # [TM, K] @ [K, Cout_pad] -> [TM, Cout_pad], bf16 inputs, f32 accumulate.
    y = jnp.dot(p_ref[...], w_ref[...], preferred_element_type=jnp.float32)
    # Zero-padded rows contribute exactly 0 to both partial sums -> stats stay exact.
    stats_ref[0:1, :] = jnp.sum(y, axis=0, keepdims=True)        # per-channel sum
    stats_ref[1:2, :] = jnp.sum(y * y, axis=0, keepdims=True)    # per-channel sum of squares
    # Rows 2..7 of the 8-row (sublane-aligned) block are never read; leave untouched.


# ---------------------------------------------------------------------------
# Pass 2: recompute conv tile, fold BN (scale/shift) + ReLU, single store.
# ---------------------------------------------------------------------------
def conv_bn_relu_kernel(p_ref, w_ref, scale_ref, shift_ref, o_ref):
    y = jnp.dot(p_ref[...], w_ref[...], preferred_element_type=jnp.float32)
    o_ref[...] = jnp.maximum(y * scale_ref[...] + shift_ref[...], 0.0)


def _im2col_nhwc_bf16(x_nhwc, kh, kw, stride, padding, dilation):
    """Returns bf16 patches [N*OH*OW, kh*kw*Cin] (column order = (kh, kw, cin)) and (OH, OW)."""
    x = jnp.pad(x_nhwc, ((0, 0), (padding, padding), (padding, padding), (0, 0)))
    x = x.astype(jnp.bfloat16)                       # cast early: all im2col intermediates bf16
    N, H, W, C = x.shape
    eff_kh = dilation * (kh - 1) + 1
    eff_kw = dilation * (kw - 1) + 1
    oh = (H - eff_kh) // stride + 1
    ow = (W - eff_kw) // stride + 1
    cols = []
    for i in range(kh):
        for j in range(kw):
            cols.append(
                x[:,
                  i * dilation: i * dilation + stride * oh: stride,
                  j * dilation: j * dilation + stride * ow: stride,
                  :]
            )  # [N, OH, OW, C]
    patches = jnp.stack(cols, axis=3)                    # [N, OH, OW, kh*kw, C]
    patches = patches.reshape(N * oh * ow, kh * kw * C)  # rows in (N, OH, OW) order
    return patches, oh, ow


@partial(jax.jit, static_argnames=("stride", "padding", "dilation"))
def conv2d_bn_relu(x_nchw, weight, bias, gamma, beta, *,
                   stride=1, padding=0, dilation=1):
    """x_nchw: [N, Cin, H, W]; weight: [Cout, Cin, KH, KW] (PyTorch layout). Returns NCHW f32."""
    N, Cin, H, W = x_nchw.shape
    Cout, _, KH, KW = weight.shape

    # Conv bias is exactly cancelled by the BN batch-mean subtraction (training mode) -> drop it.
    del bias

    x_nhwc = jnp.transpose(x_nchw, (0, 2, 3, 1))
    patches, OH, OW = _im2col_nhwc_bf16(x_nhwc, KH, KW, stride, padding, dilation)
    M, K = patches.shape

    # --- padding / tiling ----------------------------------------------------
    # Lane-dense output channels; 256-align when Cout > 128 to fill the v6e/v7x 2x256^2 MXU
    # (128 is already the native width on v5e and avoids waste for tiny Cout).
    Cout_pad = LANE if Cout <= LANE else _round_up(Cout, 2 * LANE)
    # Row tile: multiple of 16 (bf16 packs 16 rows per sublane-packed vreg), capped at 512
    # (fits v7x VMEM comfortably), and split so the "parallel" axis has >= 2 tiles (v7x 2 TCs).
    TM = min(512, max(16, _round_up(-(-M // 2), 16)))
    M_pad = _round_up(M, TM)
    n_tiles = M_pad // TM

    # Single pad each (no zeros + .at[].set round-trips); everything stays bf16.
    patches_p = jnp.pad(patches, ((0, M_pad - M), (0, 0)))
    w_mat = jnp.transpose(weight, (2, 3, 1, 0)).reshape(K, Cout).astype(jnp.bfloat16)
    w_p = jnp.pad(w_mat, ((0, 0), (0, Cout_pad - Cout)))

    # Weight BlockSpec: constant index_map -> fetched into VMEM once and reused across tiles.
    # (When K*Cout grows large, single-buffer it via pipeline_mode=pl.Buffered(1) to halve its
    #  VMEM footprint; unnecessary at these sizes.)
    w_spec = pl.BlockSpec((K, Cout_pad), lambda i: (0, 0))
    p_spec = pl.BlockSpec((TM, K), lambda i: (i, 0))

    mm_flops = 2 * M_pad * K * Cout_pad

    # --- pass 1: conv matmul -> per-tile partial stats only (no y to HBM) ----
    stats = pl.pallas_call(
        conv_stats_kernel,
        out_shape=jax.ShapeDtypeStruct((n_tiles * 8, Cout_pad), jnp.float32),
        grid_spec=pltpu.PrefetchScalarGridSpec(
            num_scalar_prefetch=0,
            grid=(n_tiles,),
            in_specs=[p_spec, w_spec],
            out_specs=pl.BlockSpec((8, Cout_pad), lambda i: (i, 0)),
        ),
        compiler_params=pltpu.CompilerParams(
            dimension_semantics=("parallel",),
            vmem_limit_bytes=VMEM_LIMIT,
        ),
        cost_estimate=pl.CostEstimate(
            flops=mm_flops,
            transcendentals=0,
            bytes_accessed=patches_p.size * 2 + w_p.size * 2 + n_tiles * 8 * Cout_pad * 4,
        ),
    )(patches_p, w_p)

    # --- global batch statistics (tiny reduction over per-tile partials) -----
    stats = stats.reshape(n_tiles, 8, Cout_pad)
    total = jnp.sum(stats[:, 0, :], axis=0)                 # sum   over all true rows
    total_sq = jnp.sum(stats[:, 1, :], axis=0)              # sumsq over all true rows
    mean = total / M
    var = jnp.maximum(total_sq / M - mean * mean, 0.0)      # biased var, clamped (cancellation)
    rstd = jax.lax.rsqrt(var + EPS)

    gamma_p = jnp.pad(gamma.astype(jnp.float32), (0, Cout_pad - Cout))
    beta_p = jnp.pad(beta.astype(jnp.float32), (0, Cout_pad - Cout))
    scale = (gamma_p * rstd).reshape(1, Cout_pad)
    shift = (beta_p - mean * gamma_p * rstd).reshape(1, Cout_pad)

    # --- pass 2: recompute conv, fused BN + ReLU, lane-dense single store ----
    out_flat = pl.pallas_call(
        conv_bn_relu_kernel,
        out_shape=jax.ShapeDtypeStruct((M_pad, Cout_pad), jnp.float32),
        grid_spec=pltpu.PrefetchScalarGridSpec(
            num_scalar_prefetch=0,
            grid=(n_tiles,),
            in_specs=[
                p_spec,
                w_spec,
                pl.BlockSpec((1, Cout_pad), lambda i: (0, 0)),
                pl.BlockSpec((1, Cout_pad), lambda i: (0, 0)),
            ],
            out_specs=pl.BlockSpec((TM, Cout_pad), lambda i: (i, 0)),
        ),
        compiler_params=pltpu.CompilerParams(
            dimension_semantics=("parallel",),
            vmem_limit_bytes=VMEM_LIMIT,
        ),
        cost_estimate=pl.CostEstimate(
            flops=mm_flops,
            transcendentals=0,
            bytes_accessed=patches_p.size * 2 + w_p.size * 2 + M_pad * Cout_pad * 4,
        ),
    )(patches_p, w_p, scale, shift)

    # NCHW epilogue to match PyTorch; returning NHWC directly would save one HBM round-trip
    # over the output if the consumer allows.
    out_nhwc = out_flat[:M, :Cout].reshape(N, OH, OW, Cout)
    return jnp.transpose(out_nhwc, (0, 3, 1, 2))


if __name__ == "__main__":
    key = jax.random.PRNGKey(0)
    k_x, k_w, k_b = jax.random.split(key, 3)

    # Small shapes consistent with the module defaults (kernel=3, stride=1, pad=0).
    N, Cin, H, W = 2, 4, 16, 16
    Cout, KH, KW = 8, 3, 3

    x = jax.random.normal(k_x, (N, Cin, H, W), dtype=jnp.float32)
    weight = jax.random.normal(k_w, (Cout, Cin, KH, KW), dtype=jnp.float32) * 0.1
    bias = jax.random.normal(k_b, (Cout,), dtype=jnp.float32) * 0.1
    gamma = jnp.ones((Cout,), dtype=jnp.float32)   # BatchNorm2d default weight init
    beta = jnp.zeros((Cout,), dtype=jnp.float32)   # BatchNorm2d default bias init

    out = conv2d_bn_relu(x, weight, bias, gamma, beta, stride=1, padding=0, dilation=1)
    jax.block_until_ready(out)

    assert out.shape == (N, Cout, H - KH + 1, W - KW + 1), out.shape
    assert bool(jnp.all(jnp.isfinite(out))), "non-finite values in output"
    assert bool(jnp.all(out >= 0.0)), "ReLU output must be non-negative"
    print("KERNEL_OK")
</pallas_src>

<mosaic_0001>
module attributes {stable_mosaic.version = 11 : i64} {
  func.func @conv_stats_kernel(%arg0: i32, %arg1: memref<208x36xbf16, #tpu.memory_space<vmem>>, %arg2: memref<36x128xbf16, #tpu.memory_space<vmem>>, %arg3: memref<8x128xf32, #tpu.memory_space<vmem>>) attributes {dimension_semantics = [#tpu.dimension_semantics<parallel>], iteration_bounds = array<i64: 2>, scalar_prefetch = 0 : i64, scratch_operands = 0 : i64, tpu.core_type = #tpu.core_type<tc>, window_params = [{transform_indices = @transform_0, window_bounds = array<i64: 208, 36>}, {pipeline_mode = #tpu.pipeline_mode<synchronous>, transform_indices = @transform_1, window_bounds = array<i64: 36, 128>}, {transform_indices = @transform_2, window_bounds = array<i64: 8, 128>}]} {
    %c0 = arith.constant 0 : index
    %c0_0 = arith.constant 0 : index
    %0 = vector.load %arg1[%c0, %c0_0] : memref<208x36xbf16, #tpu.memory_space<vmem>>, vector<208x36xbf16>
    %c0_1 = arith.constant 0 : index
    %c0_2 = arith.constant 0 : index
    %1 = vector.load %arg2[%c0_1, %c0_2] : memref<36x128xbf16, #tpu.memory_space<vmem>>, vector<36x128xbf16>
    %cst = arith.constant dense<0.000000e+00> : vector<208x128xf32>
    %2 = tpu.matmul %0, %1, %cst {dimension_numbers = #tpu.dot_dimension_numbers<[1], [0], [0], [1], [0, 0, 1, 1], [], []>} : vector<208x36xbf16>, vector<36x128xbf16>, vector<208x128xf32> -> vector<208x128xf32>
    %cst_3 = arith.constant dense<0.000000e+00> : vector<128xf32>
    %3 = vector.multi_reduction <add>, %2, %cst_3 [0] : vector<208x128xf32> to vector<128xf32>
    %4 = vector.shape_cast %3 : vector<128xf32> to vector<1x128xf32>
    %c0_4 = arith.constant 0 : index
    %c0_5 = arith.constant 0 : index
    %5 = vector.load %arg3[%c0_4, %c0_5] : memref<8x128xf32, #tpu.memory_space<vmem>>, vector<1x128xf32>
    tpu.vector_store %arg3[%c0_4, %c0_5], %4 {strides = array<i32>} : memref<8x128xf32, #tpu.memory_space<vmem>>, vector<1x128xf32>,
    %6 = arith.mulf %2, %2 : vector<208x128xf32>
    %cst_6 = arith.constant dense<0.000000e+00> : vector<128xf32>
    %7 = vector.multi_reduction <add>, %6, %cst_6 [0] : vector<208x128xf32> to vector<128xf32>
    %8 = vector.shape_cast %7 : vector<128xf32> to vector<1x128xf32>
    %c1 = arith.constant 1 : index
    %c0_7 = arith.constant 0 : index
    %9 = vector.load %arg3[%c1, %c0_7] : memref<8x128xf32, #tpu.memory_space<vmem>>, vector<1x128xf32>
    tpu.vector_store %arg3[%c1, %c0_7], %8 {strides = array<i32>} : memref<8x128xf32, #tpu.memory_space<vmem>>, vector<1x128xf32>,
    return
  }
  func.func @transform_0(%arg0: i32) -> (i32, i32) {
    %c0_i32 = arith.constant 0 : i32
    %c0_i32_0 = arith.constant 0 : i32
    return %arg0, %c0_i32 : i32, i32
  }
  func.func @transform_1(%arg0: i32) -> (i32, i32) {
    %c0_i32 = arith.constant 0 : i32
    %c0_i32_0 = arith.constant 0 : i32
    %c0_i32_1 = arith.constant 0 : i32
    return %c0_i32, %c0_i32_0 : i32, i32
  }
  func.func @transform_2(%arg0: i32) -> (i32, i32) {
    %c0_i32 = arith.constant 0 : i32
    %c0_i32_0 = arith.constant 0 : i32
    return %arg0, %c0_i32 : i32, i32
  }
}

module attributes {stable_mosaic.version = 11 : i64} {
  func.func @conv_bn_relu_kernel(%arg0: i32, %arg1: memref<208x36xbf16, #tpu.memory_space<vmem>>, %arg2: memref<36x128xbf16, #tpu.memory_space<vmem>>, %arg3: memref<1x128xf32, #tpu.memory_space<vmem>>, %arg4: memref<1x128xf32, #tpu.memory_space<vmem>>, %arg5: memref<208x128xf32, #tpu.memory_space<vmem>>) attributes {dimension_semantics = [#tpu.dimension_semantics<parallel>], iteration_bounds = array<i64: 2>, scalar_prefetch = 0 : i64, scratch_operands = 0 : i64, tpu.core_type = #tpu.core_type<tc>, window_params = [{transform_indices = @transform_0, window_bounds = array<i64: 208, 36>}, {pipeline_mode = #tpu.pipeline_mode<synchronous>, transform_indices = @transform_1, window_bounds = array<i64: 36, 128>}, {pipeline_mode = #tpu.pipeline_mode<synchronous>, transform_indices = @transform_2, window_bounds = array<i64: 1, 128>}, {pipeline_mode = #tpu.pipeline_mode<synchronous>, transform_indices = @transform_3, window_bounds = array<i64: 1, 128>}, {transform_indices = @transform_4, window_bounds = array<i64: 208, 128>}]} {
    %c0 = arith.constant 0 : index
    %c0_0 = arith.constant 0 : index
    %0 = vector.load %arg1[%c0, %c0_0] : memref<208x36xbf16, #tpu.memory_space<vmem>>, vector<208x36xbf16>
    %c0_1 = arith.constant 0 : index
    %c0_2 = arith.constant 0 : index
    %1 = vector.load %arg2[%c0_1, %c0_2] : memref<36x128xbf16, #tpu.memory_space<vmem>>, vector<36x128xbf16>
    %cst = arith.constant dense<0.000000e+00> : vector<208x128xf32>
    %2 = tpu.matmul %0, %1, %cst {dimension_numbers = #tpu.dot_dimension_numbers<[1], [0], [0], [1], [0, 0, 1, 1], [], []>} : vector<208x36xbf16>, vector<36x128xbf16>, vector<208x128xf32> -> vector<208x128xf32>
    %c0_3 = arith.constant 0 : index
    %c0_4 = arith.constant 0 : index
    %3 = vector.load %arg3[%c0_3, %c0_4] : memref<1x128xf32, #tpu.memory_space<vmem>>, vector<1x128xf32>
    %4 = vector.broadcast %3 : vector<1x128xf32> to vector<208x128xf32>
    %5 = arith.mulf %2, %4 : vector<208x128xf32>
    %c0_5 = arith.constant 0 : index
    %c0_6 = arith.constant 0 : index
    %6 = vector.load %arg4[%c0_5, %c0_6] : memref<1x128xf32, #tpu.memory_space<vmem>>, vector<1x128xf32>
    %7 = vector.broadcast %6 : vector<1x128xf32> to vector<208x128xf32>
    %8 = arith.addf %5, %7 : vector<208x128xf32>
    %cst_7 = arith.constant 0.000000e+00 : f32
    %9 = vector.broadcast %cst_7 : f32 to vector<208x128xf32>
    %10 = arith.maximumf %8, %9 : vector<208x128xf32>
    %c0_8 = arith.constant 0 : index
    %c0_9 = arith.constant 0 : index
    %11 = vector.load %arg5[%c0_8, %c0_9] : memref<208x128xf32, #tpu.memory_space<vmem>>, vector<208x128xf32>
    tpu.vector_store %arg5[%c0_8, %c0_9], %10 {strides = array<i32>} : memref<208x128xf32, #tpu.memory_space<vmem>>, vector<208x128xf32>,
    return
  }
  func.func @transform_0(%arg0: i32) -> (i32, i32) {
    %c0_i32 = arith.constant 0 : i32
    %c0_i32_0 = arith.constant 0 : i32
    return %arg0, %c0_i32 : i32, i32
  }
  func.func @transform_1(%arg0: i32) -> (i32, i32) {
    %c0_i32 = arith.constant 0 : i32
    %c0_i32_0 = arith.constant 0 : i32
    %c0_i32_1 = arith.constant 0 : i32
    return %c0_i32, %c0_i32_0 : i32, i32
  }
  func.func @transform_2(%arg0: i32) -> (i32, i32) {
    %c0_i32 = arith.constant 0 : i32
    %c0_i32_0 = arith.constant 0 : i32
    %c0_i32_1 = arith.constant 0 : i32
    return %c0_i32, %c0_i32_0 : i32, i32
  }
  func.func @transform_3(%arg0: i32) -> (i32, i32) {
    %c0_i32 = arith.constant 0 : i32
    %c0_i32_0 = arith.constant 0 : i32
    %c0_i32_1 = arith.constant 0 : i32
    return %c0_i32, %c0_i32_0 : i32, i32
  }
  func.func @transform_4(%arg0: i32) -> (i32, i32) {
    %c0_i32 = arith.constant 0 : i32
    %c0_i32_0 = arith.constant 0 : i32
    return %arg0, %c0_i32 : i32, i32
  }
}

</mosaic_0001>

<llo_original>
// kernel: conv2d_bn_relu.3
$region0: #{conv2d_bn_relu.3}
  #allocation0 [shape = 'u32[]', space=smem, size = 0x4, offset = 0x4, fixed_abs, tag = 'smem constant byte address 0x4 - core index']
  #allocation1 [shape = 'u32[144,128]{1,0:T(1,128)}', space=vmem, size = 0x12000, scoped, tag = 'internal scratch']
  %s0 = inlined_call_operand.vmem [shape: bf16[416,36], index: 0, kind: input, shape index: {}]
  %s1 = inlined_call_operand.vmem [shape: bf16[36,128], index: 1, kind: input, shape index: {}]
  %s2 = inlined_call_operand.vmem [shape: f32[1,128], index: 2, kind: input, shape index: {}]
  %s3 = inlined_call_operand.vmem [shape: f32[1,128], index: 3, kind: input, shape index: {}]
  %s4 = inlined_call_operand.vmem [shape: f32[416,128], index: 4, kind: output, shape index: {}]
  %s5 = sld [smem:[#allocation0]]
  $region49: #{conv2d_bn_relu.3} parent=0
    _
  %s7 = ssub.s32 1, %s5
  %s8 = scalar_select 0, %s7, %s5
  loop: start=0, step=1, limit=4
  $region2: #{conv2d_bn_relu.3} parent=0 // loop_pre_header
    _
  $region3: #{conv2d_bn_relu.3} parent=0 // loop_header
    %s10 = sphi 0, %s14
    %p11 = scmp.ge.s32.totalorder %s10, 4
    %s20 = sphi 0, %s22
    %s23 = sphi 0, %s20
    %s24 = sphi 0, %s23
    %s40 = sphi 0, %s24
    %s44 = sphi 0, %s44
    %s46 = sphi 0, %s44
    %s47 = sphi 0, %s46
    %s61 = sphi 0, %s47
    %s65 = sphi 0, %s65
    %s67 = sphi 0, %s65
    %s68 = sphi 0, %s67
    %s82 = sphi 0, %s68
    %s86 = sphi 0, %s86
    %s88 = sphi 0, %s86
    %s89 = sphi 0, %s88
    %s103 = sphi 0, %s89
    %s109 = sphi 0, %s111
    %s112 = sphi 0, %s109
    %s113 = sphi 0, %s112
    %s129 = sphi 0, %s113
  $region4: #{conv2d_bn_relu.3} parent=0 // loop_header_branch
    %13 = sbr.rel (%p11) target = $region8
  $region5: #{conv2d_bn_relu.3} parent=0 // loop_body
    %s15 = ssub.s32 %s10, 1
    %s16 = ssub.s32 %s10, 2
    %s17 = sadd.s32 %s10, 1
    %s18 = ssub.s32 %s10, %s17
    %p19 = scmp.eq.s32.totalorder %s18, 0
    %s21 = sadd.s32 %s20, 1
    %s22 = scalar_select %p19, %s20, %s21
    %p25 = pneg %p19
    %p26 = scmp.eq.s32.totalorder %s10, 1
    %p27 = por %p25, %p26
    %p28 = scmp.ne.s32.totalorder %s20, %s23
    %p29 = scmp.eq.s32.totalorder %s10, 0
    %p30 = por %p28, %p29
    %p31 = scmp.ne.s32.totalorder %s20, %s23
    %p32 = scmp.eq.s32.totalorder %s15, 1
    %p33 = por %p31, %p32
    %p34 = scmp.ne.s32.totalorder %s23, %s24
    %p35 = scmp.eq.s32.totalorder %s15, 0
    %p36 = por %p34, %p35
    %p37 = scmp.ne.s32.totalorder %s23, %s24
    %p38 = scmp.eq.s32.totalorder %s16, 1
    %p39 = por %p37, %p38
    %p41 = scmp.ne.s32.totalorder %s24, %s40
    %p42 = scmp.eq.s32.totalorder %s16, 0
    %p43 = por %p41, %p42
    %s45 = sadd.s32 %s44, 1
    %p48 = scmp.eq.s32.totalorder %s10, 1
    %p49 = scmp.ne.s32.totalorder %s44, %s46
    %p50 = scmp.eq.s32.totalorder %s10, 0
    %p51 = por %p49, %p50
    %p52 = scmp.ne.s32.totalorder %s44, %s46
    %p53 = scmp.eq.s32.totalorder %s15, 1
    %p54 = por %p52, %p53
    %p55 = scmp.ne.s32.totalorder %s46, %s47
    %p56 = scmp.eq.s32.totalorder %s15, 0
    %p57 = por %p55, %p56
    %p58 = scmp.ne.s32.totalorder %s46, %s47
    %p59 = scmp.eq.s32.totalorder %s16, 1
    %p60 = por %p58, %p59
    %p62 = scmp.ne.s32.totalorder %s47, %s61
    %p63 = scmp.eq.s32.totalorder %s16, 0
    %p64 = por %p62, %p63
    %s66 = sadd.s32 %s65, 1
    %p69 = scmp.eq.s32.totalorder %s10, 1
    %p70 = scmp.ne.s32.totalorder %s65, %s67
    %p71 = scmp.eq.s32.totalorder %s10, 0
    %p72 = por %p70, %p71
    %p73 = scmp.ne.s32.totalorder %s65, %s67
    %p74 = scmp.eq.s32.totalorder %s15, 1
    %p75 = por %p73, %p74
    %p76 = scmp.ne.s32.totalorder %s67, %s68
    %p77 = scmp.eq.s32.totalorder %s15, 0
    %p78 = por %p76, %p77
    %p79 = scmp.ne.s32.totalorder %s67, %s68
    %p80 = scmp.eq.s32.totalorder %s16, 1
    %p81 = por %p79, %p80
    %p83 = scmp.ne.s32.totalorder %s68, %s82
    %p84 = scmp.eq.s32.totalorder %s16, 0
    %p85 = por %p83, %p84
    %s87 = sadd.s32 %s86, 1
    %p90 = scmp.eq.s32.totalorder %s10, 1
    %p91 = scmp.ne.s32.totalorder %s86, %s88
    %p92 = scmp.eq.s32.totalorder %s10, 0
    %p93 = por %p91, %p92
    %p94 = scmp.ne.s32.totalorder %s86, %s88
    %p95 = scmp.eq.s32.totalorder %s15, 1
    %p96 = por %p94, %p95
    %p97 = scmp.ne.s32.totalorder %s88, %s89
    %p98 = scmp.eq.s32.totalorder %s15, 0
    %p99 = por %p97, %p98
    %p100 = scmp.ne.s32.totalorder %s88, %s89
    %p101 = scmp.eq.s32.totalorder %s16, 1
    %p102 = por %p100, %p101
    %p104 = scmp.ne.s32.totalorder %s89, %s103
    %p105 = scmp.eq.s32.totalorder %s16, 0
    %p106 = por %p104, %p105
    %s107 = ssub.s32 %s10, %s17
    %p108 = scmp.eq.s32.totalorder %s107, 0
    %s110 = sadd.s32 %s109, 1
    %s111 = scalar_select %p108, %s109, %s110
    %p114 = pneg %p108
    %p115 = scmp.eq.s32.totalorder %s10, 1
    %p116 = por %p114, %p115
    %p117 = scmp.ne.s32.totalorder %s109, %s112
    %p118 = scmp.eq.s32.totalorder %s10, 0
    %p119 = por %p117, %p118
    %p120 = scmp.ne.s32.totalorder %s109, %s112
    %p121 = scmp.eq.s32.totalorder %s15, 1
    %p122 = por %p120, %p121
    %p123 = scmp.ne.s32.totalorder %s112, %s113
    %p124 = scmp.eq.s32.totalorder %s15, 0
    %p125 = por %p123, %p124
    %p126 = scmp.ne.s32.totalorder %s112, %s113
    %p127 = scmp.eq.s32.totalorder %s16, 1
    %p128 = por %p126, %p127
    %p130 = scmp.ne.s32.totalorder %s113, %s129
    %p131 = scmp.eq.s32.totalorder %s16, 0
    %p132 = por %p130, %p131
    %p133 = scmp.le.s32.totalorder 1, %s10
    %p134 = scmp.lt.s32.totalorder %s10, 3
    %p135 = pnand %p133, %p134
    %p136 = pneg %p135
    // Predicated region
    $region9: #{conv2d_bn_relu.3} parent=5 // pred_check
      _
    $region10: #{conv2d_bn_relu.3} parent=5 // pred_check_branch
      %138 = sbr.rel (%p135) target = $region12
    $region11: #{conv2d_bn_relu.3} parent=5 // pred_region
      %s139 = ssub.s32 %s10, 1
      // Predicated region
      $region13: #{conv2d_bn_relu.3} parent=11 // pred_check
        %p140 = pneg %p57
      $region14: #{conv2d_bn_relu.3} parent=11 // pred_check_branch
        %142 = sbr.rel (%p140) target = $region16
      $region15: #{conv2d_bn_relu.3} parent=11 // pred_region
        _
      $region16: #{conv2d_bn_relu.3} parent=11 // pred_fallthru
        _
      // Predicated region
      $region17: #{conv2d_bn_relu.3} parent=11 // pred_check
        %p143 = pneg %p78
      $region18: #{conv2d_bn_relu.3} parent=11 // pred_check_branch
        %145 = sbr.rel (%p143) target = $region20
      $region19: #{conv2d_bn_relu.3} parent=11 // pred_region
        _
      $region20: #{conv2d_bn_relu.3} parent=11 // pred_fallthru
        _
      // Predicated region
      $region21: #{conv2d_bn_relu.3} parent=11 // pred_check
        %p146 = pneg %p99
      $region22: #{conv2d_bn_relu.3} parent=11 // pred_check_branch
        %148 = sbr.rel (%p146) target = $region24
      $region23: #{conv2d_bn_relu.3} parent=11 // pred_region
        _
      $region24: #{conv2d_bn_relu.3} parent=11 // pred_fallthru
        _
    $region12: #{conv2d_bn_relu.3} parent=5 // pred_fallthru
      _
    %p149 = scmp.lt.s32.totalorder %s10, 2
    // Predicated region
    $region25: #{conv2d_bn_relu.3} parent=5 // pred_check
      %p150 = pneg %p149
    $region26: #{conv2d_bn_relu.3} parent=5 // pred_check_branch
      %152 = sbr.rel (%p150) target = $region28
    $region27: #{conv2d_bn_relu.3} parent=5 // pred_region
      // Predicated region
      $region29: #{conv2d_bn_relu.3} parent=27 // pred_check
        %p153 = pneg %p30
      $region30: #{conv2d_bn_relu.3} parent=27 // pred_check_branch
        %155 = sbr.rel (%p153) target = $region32
      $region31: #{conv2d_bn_relu.3} parent=27 // pred_region
        %s156 = smul.u32 26, %s10
        %p157 = scmp.lt.s32.totalorder %s156, 51
        %s158 = scalar_select %p157, %s156, 51
        %s159 = smul.addr %s158, 4
        %s160 = scalar_lea.vmem %s0, %s159
        %s161 = smul.u32 26, %s10
      $region32: #{conv2d_bn_relu.3} parent=27 // pred_fallthru
        _
    $region28: #{conv2d_bn_relu.3} parent=5 // pred_fallthru
      _
    %p162 = scmp.le.s32.totalorder 1, %s10
    %p163 = scmp.lt.s32.totalorder %s10, 3
    %p164 = pnand %p162, %p163
    %p165 = pneg %p164
    // Predicated region
    $region33: #{conv2d_bn_relu.3} parent=5 // pred_check
      _
    $region34: #{conv2d_bn_relu.3} parent=5 // pred_check_branch
      %167 = sbr.rel (%p164) target = $region36
    $region35: #{conv2d_bn_relu.3} parent=5 // pred_region
      %s168 = ssub.s32 %s10, 1
      %s169 = smul.u32 26, %s15
      %p170 = scmp.lt.s32.totalorder %s169, 51
      %s171 = scalar_select %p170, %s169, 51
      %s172 = smul.addr %s171, 4
      %s173 = scalar_lea.vmem %s0, %s172
      %p174 = pneg %p36
      %p175 = pneg %p33
      %p176 = pneg %p57
      %p177 = pneg %p54
      %p178 = pneg %p78
      %p179 = pneg %p75
      %p180 = pneg %p99
      %p181 = pneg %p96
      %p182 = pneg %p125
      %p183 = pneg %p122
      %s184 = smul.u32 26, %s15
      %p185 = scmp.lt.s32.totalorder %s184, 51
      %s186 = scalar_select %p185, %s184, 51
      %s187 = smul.addr %s186, 8
      %s188 = scalar_lea.vmem %s4, %s187
      %s189 = smul.u32 26, %s15
      %p190 = scmp.lt.s32.totalorder %s189, 51
      %s191 = scalar_select %p190, %s189, 51
      %s192 = smul.addr %s191, 4
      %s193 = scalar_lea.vmem %s0, %s192
      %s194 = smul.u32 26, %s15
      %s195 = smul.u32 26, %s15
      %p196 = scmp.lt.s32.totalorder %s195, 51
      %s197 = scalar_select %p196, %s195, 51
      %s198 = smul.addr %s197, 8
      %s199 = scalar_lea.vmem %s4, %s198
      %s200 = smul.u32 26, %s15
      %v202 = vld [vmem:[%s193] sm:$0xf]
      %v203 = vld [vmem:[%s193 + $0x4] sm:$0xf]
      %v204 = vld [vmem:[%s193 + $0x8] sm:$0xf]
      %v205 = vld [vmem:[%s193 + $0xc] sm:$0xf]
      %v206 = vld [vmem:[%s193 + $0x10] sm:$0xf]
      %v207 = vld [vmem:[%s193 + $0x14] sm:$0xf]
      %v208 = vld [vmem:[%s193 + $0x18] sm:$0xf]
      %v209 = vld [vmem:[%s193 + $0x1c] sm:$0xf]
      %v210 = vld [vmem:[%s193 + $0x20] sm:$0xf]
      %v211 = vld [vmem:[%s193 + $0x24] sm:$0xf]
      %v212 = vld [vmem:[%s193 + $0x28] sm:$0xf]
      %v213 = vld [vmem:[%s193 + $0x2c] sm:$0xf]
      %v214 = vld [vmem:[%s193 + $0x30] sm:$0xf]
      %v215 = vld [vmem:[%s193 + $0x34] sm:$0xf]
      %v216 = vld [vmem:[%s193 + $0x38] sm:$0xf]
      %v217 = vld [vmem:[%s193 + $0x3c] sm:$0xf]
      %v218 = vld [vmem:[%s193 + $0x40] sm:$0xf]
      %v219 = vld [vmem:[%s193 + $0x44] sm:$0xf]
      %v220 = vld [vmem:[%s193 + $0x48] sm:$0xf]
      %v221 = vld [vmem:[%s193 + $0x4c] sm:$0xf]
      %v222 = vld [vmem:[%s193 + $0x50] sm:$0xf]
      %v223 = vld [vmem:[%s193 + $0x54] sm:$0xf]
      %v224 = vld [vmem:[%s193 + $0x58] sm:$0xf]
      %v225 = vld [vmem:[%s193 + $0x5c] sm:$0xf]
      %v226 = vld [vmem:[%s193 + $0x60] sm:$0xf]
      %v227 = vld [vmem:[%s193 + $0x64] sm:$0xf]
      %v228 = vld [vmem:[%s1] sm:$0xf]
      %v229 = vld [vmem:[%s1 + $0x4] sm:$0xf]
      %v230 = vld [vmem:[%s1 + $0x8] sm:$0xf]
      %v231 = vld [vmem:[%s1 + $0xc] sm:$0xf]
      %v232 = vld [vmem:[%s1 + $0x10] sm:$0x3]
      %v259 = vunpack.c.l.b16 %v202
      %v260 = vunpack.c.l.b16 %v203
      %v261 = vunpack.c.l.b16 %v204
      %v262 = vunpack.c.l.b16 %v205
      %v263 = vunpack.c.l.b16 %v206
      %v264 = vunpack.c.l.b16 %v207
      %v265 = vunpack.c.l.b16 %v208
      %v266 = vunpack.c.l.b16 %v209
      %v267 = vunpack.c.l.b16 %v210
      %v268 = vunpack.c.l.b16 %v211
      %v269 = vunpack.c.l.b16 %v212
      %v270 = vunpack.c.l.b16 %v213
      %v271 = vunpack.c.l.b16 %v214
      %v272 = vunpack.c.l.b16 %v215
      %v273 = vunpack.c.l.b16 %v216
      %v274 = vunpack.c.l.b16 %v217
      %v275 = vunpack.c.l.b16 %v218
      %v276 = vunpack.c.l.b16 %v219
      %v277 = vunpack.c.l.b16 %v220
      %v278 = vunpack.c.l.b16 %v221
      %v279 = vunpack.c.l.b16 %v222
      %v280 = vunpack.c.l.b16 %v223
      %v281 = vunpack.c.l.b16 %v224
      %v282 = vunpack.c.l.b16 %v225
      %v283 = vunpack.c.l.b16 %v226
      %v284 = vunpack.c.l.b16 %v227
      %v285 = vpack.c.b16 %v260, %v259
      %v286 = vpack.c.b16 %v262, %v261
      %v287 = vpack.c.b16 %v264, %v263
      %v288 = vpack.c.b16 %v266, %v265
      %v289 = vpack.c.b16 %v268, %v267
      %v290 = vpack.c.b16 %v270, %v269
      %v291 = vpack.c.b16 %v272, %v271
      %v292 = vpack.c.b16 %v274, %v273
      %v293 = vpack.c.b16 %v276, %v275
      %v294 = vpack.c.b16 %v278, %v277
      %v295 = vpack.c.b16 %v280, %v279
      %v296 = vpack.c.b16 %v282, %v281
      %v297 = vpack.c.b16 %v284, %v283
      %v303 = vunpack.c.l.b16 %v228
      %v304 = vunpack.c.l.b16 %v229
      %v305 = vunpack.c.l.b16 %v230
      %v306 = vunpack.c.l.b16 %v231
      %v307 = vunpack.c.l.b16 %v232
      %v308 = vpack.c.b16 %v304, %v303
      %v309 = vpack.c.b16 %v306, %v305
      %v310 = vpack.c.b16 %v307, %v307
      %vm313 = vcmask 293888
      %v315 = vsel %vm313, %v285, 0
      %v318 = vsel %vm313, %v286, 0
      %v321 = vsel %vm313, %v287, 0
      %v324 = vsel %vm313, %v288, 0
      %v327 = vsel %vm313, %v289, 0
      %v330 = vsel %vm313, %v290, 0
      %v333 = vsel %vm313, %v291, 0
      %v336 = vsel %vm313, %v292, 0
      %v339 = vsel %vm313, %v293, 0
      %v342 = vsel %vm313, %v294, 0
      %v345 = vsel %vm313, %v295, 0
      %v348 = vsel %vm313, %v296, 0
      %v351 = vsel %vm313, %v297, 0
      %vm353 = vcmask 1041408
      %v355 = vsel %vm353, %v310, 0
      %357 = vmatprep.subr.bf16.mxu0 0
      %358 = vmatpush1.bf16.msra.mxu0 0
      %359 = vmatprep.subr.bf16.mxu0 0
      %360 = vmatpush1.bf16.msra.mxu0 0
      %361 = vmatprep.subr.bf16.mxu0 0
      %362 = vmatpush1.bf16.msra.mxu0 0
      %363 = vmatprep.subr.bf16.mxu0 0
      %364 = vmatpush1.bf16.msra.mxu0 0
      %365 = vmatprep.subr.bf16.mxu0 0
      %366 = vmatpush1.bf16.msra.mxu0 0
      %367 = vmatprep.subr.bf16.mxu0 0
      %368 = vmatpush1.bf16.msra.mxu0 %v355
      %369 = vmatprep.subr.bf16.mxu0 0
      %370 = vmatpush1.bf16.msra.mxu0 %v309
      %371 = vmatprep.subr.bf16.mxu0 0
      %372 = vmatpush1.bf16.msra.mxu0 %v308
      %373 = vmatprep.subr.bf16.mxu0 0
      %374 = vmatpush2.bf16.msra.mxu0 0
      %375 = vmatprep.subr.bf16.mxu0 0
      %376 = vmatpush2.bf16.msra.mxu0 0
      %377 = vmatprep.subr.bf16.mxu0 0
      %378 = vmatpush2.bf16.msra.mxu0 0
      %379 = vmatprep.subr.bf16.mxu0 0
      %380 = vmatpush2.bf16.msra.mxu0 0
      %381 = vmatprep.subr.bf16.mxu0 0
      %382 = vmatpush2.bf16.msra.mxu0 0
      %383 = vmatprep.subr.bf16.mxu0 0
      %384 = vmatpush2.bf16.msra.mxu0 0
      %385 = vmatprep.subr.bf16.mxu0 0
      %386 = vmatpush2.bf16.msra.mxu0 0
      %387 = vmatprep.subr.bf16.mxu0 0
      %388 = vmatpush2.bf16.msra.mxu0 0
      %389 = vmatprep.mubr.bf16.mxu0 0
      %390 = vmatmul.mubr.bf16.gmra.mxu0 %v315
      %v391 = vpop.f32.mrf.mxu0
      %v392 = vadd.f32 0.0, %v391
      %v393 = vpop.f32.mrf.mxu0
      %v394 = vpop.f32.mrf.mxu0
      %v395 = vadd.f32 0.0, %v394
      %v396 = vpop.f32.mrf.mxu0
      %397 = vmatprep.mubr.bf16.mxu0 0
      %398 = vmatmul.mubr.bf16.gmra.mxu0 %v318
      %v399 = vpop.f32.mrf.mxu0
      %v400 = vadd.f32 0.0, %v399
      %v401 = vpop.f32.mrf.mxu0
      %v402 = vpop.f32.mrf.mxu0
      %v403 = vadd.f32 0.0, %v402
      %v404 = vpop.f32.mrf.mxu0
      %405 = vmatprep.mubr.bf16.mxu0 0
      %406 = vmatmul.mubr.bf16.gmra.mxu0 %v321
      %v407 = vpop.f32.mrf.mxu0
      %v408 = vadd.f32 0.0, %v407
      %v409 = vpop.f32.mrf.mxu0
      %v410 = vpop.f32.mrf.mxu0
      %v411 = vadd.f32 0.0, %v410
      %v412 = vpop.f32.mrf.mxu0
      %413 = vmatprep.mubr.bf16.mxu0 0
      %414 = vmatmul.mubr.bf16.gmra.mxu0 %v324
      %v415 = vpop.f32.mrf.mxu0
      %v416 = vadd.f32 0.0, %v415
      %v417 = vpop.f32.mrf.mxu0
      %v418 = vpop.f32.mrf.mxu0
      %v419 = vadd.f32 0.0, %v418
      %v420 = vpop.f32.mrf.mxu0
      %421 = vmatprep.mubr.bf16.mxu0 0
      %422 = vmatmul.mubr.bf16.gmra.mxu0 %v327
      %v423 = vpop.f32.mrf.mxu0
      %v424 = vadd.f32 0.0, %v423
      %v425 = vpop.f32.mrf.mxu0
      %v426 = vpop.f32.mrf.mxu0
      %v427 = vadd.f32 0.0, %v426
      %v428 = vpop.f32.mrf.mxu0
      %429 = vmatprep.mubr.bf16.mxu0 0
      %430 = vmatmul.mubr.bf16.gmra.mxu0 %v330
      %v431 = vpop.f32.mrf.mxu0
      %v432 = vadd.f32 0.0, %v431
      %v433 = vpop.f32.mrf.mxu0
      %v434 = vpop.f32.mrf.mxu0
      %v435 = vadd.f32 0.0, %v434
      %v436 = vpop.f32.mrf.mxu0
      %437 = vmatprep.mubr.bf16.mxu0 0
      %438 = vmatmul.mubr.bf16.gmra.mxu0 %v333
      %v439 = vpop.f32.mrf.mxu0
      %v440 = vadd.f32 0.0, %v439
      %v441 = vpop.f32.mrf.mxu0
      %v442 = vpop.f32.mrf.mxu0
      %v443 = vadd.f32 0.0, %v442
      %v444 = vpop.f32.mrf.mxu0
      %445 = vmatprep.mubr.bf16.mxu0 0
      %446 = vmatmul.mubr.bf16.gmra.mxu0 %v336
      %v447 = vpop.f32.mrf.mxu0
      %v448 = vadd.f32 0.0, %v447
      %v449 = vpop.f32.mrf.mxu0
      %v450 = vpop.f32.mrf.mxu0
      %v451 = vadd.f32 0.0, %v450
      %v452 = vpop.f32.mrf.mxu0
      %453 = vmatprep.mubr.bf16.mxu0 0
      %454 = vmatmul.mubr.bf16.gmra.mxu0 %v339
      %v455 = vpop.f32.mrf.mxu0
      %v456 = vadd.f32 0.0, %v455
      %v457 = vpop.f32.mrf.mxu0
      %v458 = vpop.f32.mrf.mxu0
      %v459 = vadd.f32 0.0, %v458
      %v460 = vpop.f32.mrf.mxu0
      %461 = vmatprep.mubr.bf16.mxu0 0
      %462 = vmatmul.mubr.bf16.gmra.mxu0 %v342
      %v463 = vpop.f32.mrf.mxu0
      %v464 = vadd.f32 0.0, %v463
      %v465 = vpop.f32.mrf.mxu0
      %v466 = vpop.f32.mrf.mxu0
      %v467 = vadd.f32 0.0, %v466
      %v468 = vpop.f32.mrf.mxu0
      %469 = vmatprep.mubr.bf16.mxu0 0
      %470 = vmatmul.mubr.bf16.gmra.mxu0 %v345
      %v471 = vpop.f32.mrf.mxu0
      %v472 = vadd.f32 0.0, %v471
      %v473 = vpop.f32.mrf.mxu0
      %v474 = vpop.f32.mrf.mxu0
      %v475 = vadd.f32 0.0, %v474
      %v476 = vpop.f32.mrf.mxu0
      %477 = vmatprep.mubr.bf16.mxu0 0
      %478 = vmatmul.mubr.bf16.gmra.mxu0 %v348
      %v479 = vpop.f32.mrf.mxu0
      %v480 = vadd.f32 0.0, %v479
      %v481 = vpop.f32.mrf.mxu0
      %v482 = vpop.f32.mrf.mxu0
      %v483 = vadd.f32 0.0, %v482
      %v484 = vpop.f32.mrf.mxu0
      %485 = vmatprep.mubr.bf16.mxu0 0
      %486 = vmatmul.mubr.bf16.gmra.mxu0 %v351
      %v487 = vpop.f32.mrf.mxu0
      %v488 = vadd.f32 0.0, %v487
      %v489 = vpop.f32.mrf.mxu0
      %v490 = vpop.f32.mrf.mxu0
      %v491 = vadd.f32 0.0, %v490
      %v492 = vpop.f32.mrf.mxu0
      %493 = vdwg.mxu0
      %v494 = vld [vmem:[%s2] sm:$0x1]
      %v496 = vlaneseq
      %v497 = vshrl.u32 %v496, 7
      %v498 = vsub.s32 0, %v497
      %v499 = vrot.slane %v494, %v498
      %v501 = vmul.f32 %v392, %v499
      %v502 = vmul.f32 %v395, %v499
      %v503 = vmul.f32 %v400, %v499
      %v504 = vmul.f32 %v403, %v499
      %v505 = vmul.f32 %v408, %v499
      %v506 = vmul.f32 %v411, %v499
      %v507 = vmul.f32 %v416, %v499
      %v508 = vmul.f32 %v419, %v499
      %v509 = vmul.f32 %v424, %v499
      %v510 = vmul.f32 %v427, %v499
      %v511 = vmul.f32 %v432, %v499
      %v512 = vmul.f32 %v435, %v499
      %v513 = vmul.f32 %v440, %v499
      %v514 = vmul.f32 %v443, %v499
      %v515 = vmul.f32 %v448, %v499
      %v516 = vmul.f32 %v451, %v499
      %v517 = vmul.f32 %v456, %v499
      %v518 = vmul.f32 %v459, %v499
      %v519 = vmul.f32 %v464, %v499
      %v520 = vmul.f32 %v467, %v499
      %v521 = vmul.f32 %v472, %v499
      %v522 = vmul.f32 %v475, %v499
      %v523 = vmul.f32 %v480, %v499
      %v524 = vmul.f32 %v483, %v499
      %v525 = vmul.f32 %v488, %v499
      %v526 = vmul.f32 %v491, %v499
      %v527 = vld [vmem:[%s3] sm:$0x1]
      %v529 = vlaneseq
      %v530 = vshrl.u32 %v529, 7
      %v531 = vsub.s32 0, %v530
      %v532 = vrot.slane %v527, %v531
      %v534 = vadd.f32 %v501, %v532
      %v535 = vadd.f32 %v502, %v532
      %v536 = vadd.f32 %v503, %v532
      %v537 = vadd.f32 %v504, %v532
      %v538 = vadd.f32 %v505, %v532
      %v539 = vadd.f32 %v506, %v532
      %v540 = vadd.f32 %v507, %v532
      %v541 = vadd.f32 %v508, %v532
      %v542 = vadd.f32 %v509, %v532
      %v543 = vadd.f32 %v510, %v532
      %v544 = vadd.f32 %v511, %v532
      %v545 = vadd.f32 %v512, %v532
      %v546 = vadd.f32 %v513, %v532
      %v547 = vadd.f32 %v514, %v532
      %v548 = vadd.f32 %v515, %v532
      %v549 = vadd.f32 %v516, %v532
      %v550 = vadd.f32 %v517, %v532
      %v551 = vadd.f32 %v518, %v532
      %v552 = vadd.f32 %v519, %v532
      %v553 = vadd.f32 %v520, %v532
      %v554 = vadd.f32 %v521, %v532
      %v555 = vadd.f32 %v522, %v532
      %v556 = vadd.f32 %v523, %v532
      %v557 = vadd.f32 %v524, %v532
      %v558 = vadd.f32 %v525, %v532
      %v559 = vadd.f32 %v526, %v532
      %v560 = vmax.f32 %v534, 0.0
      %v561 = vmax.f32 %v535, 0.0
      %v562 = vmax.f32 %v536, 0.0
      %v563 = vmax.f32 %v537, 0.0
      %v564 = vmax.f32 %v538, 0.0
      %v565 = vmax.f32 %v539, 0.0
      %v566 = vmax.f32 %v540, 0.0
      %v567 = vmax.f32 %v541, 0.0
      %v568 = vmax.f32 %v542, 0.0
      %v569 = vmax.f32 %v543, 0.0
      %v570 = vmax.f32 %v544, 0.0
      %v571 = vmax.f32 %v545, 0.0
      %v572 = vmax.f32 %v546, 0.0
      %v573 = vmax.f32 %v547, 0.0
      %v574 = vmax.f32 %v548, 0.0
      %v575 = vmax.f32 %v549, 0.0
      %v576 = vmax.f32 %v550, 0.0
      %v577 = vmax.f32 %v551, 0.0
      %v578 = vmax.f32 %v552, 0.0
      %v579 = vmax.f32 %v553, 0.0
      %v580 = vmax.f32 %v554, 0.0
      %v581 = vmax.f32 %v555, 0.0
      %v582 = vmax.f32 %v556, 0.0
      %v583 = vmax.f32 %v557, 0.0
      %v584 = vmax.f32 %v558, 0.0
      %v585 = vmax.f32 %v559, 0.0
      %586 = vst [vmem:[%s199] sm:$0xff] %v560
      %587 = vst [vmem:[%s199 + $0x8] sm:$0xff] %v561
      %588 = vst [vmem:[%s199 + $0x10] sm:$0xff] %v562
      %589 = vst [vmem:[%s199 + $0x18] sm:$0xff] %v563
      %590 = vst [vmem:[%s199 + $0x20] sm:$0xff] %v564
      %591 = vst [vmem:[%s199 + $0x28] sm:$0xff] %v565
      %592 = vst [vmem:[%s199 + $0x30] sm:$0xff] %v566
      %593 = vst [vmem:[%s199 + $0x38] sm:$0xff] %v567
      %594 = vst [vmem:[%s199 + $0x40] sm:$0xff] %v568
      %595 = vst [vmem:[%s199 + $0x48] sm:$0xff] %v569
      %596 = vst [vmem:[%s199 + $0x50] sm:$0xff] %v570
      %597 = vst [vmem:[%s199 + $0x58] sm:$0xff] %v571
      %598 = vst [vmem:[%s199 + $0x60] sm:$0xff] %v572
      %599 = vst [vmem:[%s199 + $0x68] sm:$0xff] %v573
      %600 = vst [vmem:[%s199 + $0x70] sm:$0xff] %v574
      %601 = vst [vmem:[%s199 + $0x78] sm:$0xff] %v575
      %602 = vst [vmem:[%s199 + $0x80] sm:$0xff] %v576
      %603 = vst [vmem:[%s199 + $0x88] sm:$0xff] %v577
      %604 = vst [vmem:[%s199 + $0x90] sm:$0xff] %v578
      %605 = vst [vmem:[%s199 + $0x98] sm:$0xff] %v579
      %606 = vst [vmem:[%s199 + $0xa0] sm:$0xff] %v580
      %607 = vst [vmem:[%s199 + $0xa8] sm:$0xff] %v581
      %608 = vst [vmem:[%s199 + $0xb0] sm:$0xff] %v582
      %609 = vst [vmem:[%s199 + $0xb8] sm:$0xff] %v583
      %610 = vst [vmem:[%s199 + $0xc0] sm:$0xff] %v584
      %611 = vst [vmem:[%s199 + $0xc8] sm:$0xff] %v585
      %s612 = smul.u32 26, %s15
      %p613 = scmp.lt.s32.totalorder %s612, 51
      %s614 = scalar_select %p613, %s612, 51
      %s615 = smul.addr %s614, 8
      %s616 = scalar_lea.vmem %s4, %s615
      // Predicated region
      $region37: #{conv2d_bn_relu.3} parent=35 // pred_check
        %p617 = pneg %p122
      $region38: #{conv2d_bn_relu.3} parent=35 // pred_check_branch
        %619 = sbr.rel (%p617) target = $region40
      $region39: #{conv2d_bn_relu.3} parent=35 // pred_region
        %s620 = smul.u32 26, %s15
      $region40: #{conv2d_bn_relu.3} parent=35 // pred_fallthru
        _
    $region36: #{conv2d_bn_relu.3} parent=5 // pred_fallthru
      _
    %p621 = scmp.le.s32.totalorder 2, %s10
    // Predicated region
    $region41: #{conv2d_bn_relu.3} parent=5 // pred_check
      %p622 = pneg %p621
    $region42: #{conv2d_bn_relu.3} parent=5 // pred_check_branch
      %624 = sbr.rel (%p622) target = $region44
    $region43: #{conv2d_bn_relu.3} parent=5 // pred_region
      %s625 = ssub.s32 %s10, 2
      // Predicated region
      $region45: #{conv2d_bn_relu.3} parent=43 // pred_check
        %p626 = pneg %p128
      $region46: #{conv2d_bn_relu.3} parent=43 // pred_check_branch
        %628 = sbr.rel (%p626) target = $region48
      $region47: #{conv2d_bn_relu.3} parent=43 // pred_region
        %s629 = smul.u32 26, %s16
        %p630 = scmp.lt.s32.totalorder %s629, 51
        %s631 = scalar_select %p630, %s629, 51
        %s632 = smul.addr %s631, 8
        %s633 = scalar_lea.vmem %s4, %s632
      $region48: #{conv2d_bn_relu.3} parent=43 // pred_fallthru
        _
    $region44: #{conv2d_bn_relu.3} parent=5 // pred_fallthru
      _
  $region6: #{conv2d_bn_relu.3} parent=0 // loop_footer
    %s14 = sadd.s32 1, %s10
  $region7: #{conv2d_bn_relu.3} parent=0 // loop_footer_branch
    %9 = sbr.rel target = $region3
  $region8: #{conv2d_bn_relu.3} parent=0 // loop_exit
    _

// kernel: conv2d_bn_relu.2
$region0: #{conv2d_bn_relu.2}
  #allocation0 [shape = 'u32[]', space=smem, size = 0x4, offset = 0x4, fixed_abs, tag = 'smem constant byte address 0x4 - core index']
  #allocation1 [shape = 'u32[144,128]{1,0:T(1,128)}', space=vmem, size = 0x12000, scoped, tag = 'internal scratch']
  %s0 = inlined_call_operand.vmem [shape: bf16[416,36], index: 0, kind: input, shape index: {}]
  %s1 = inlined_call_operand.vmem [shape: bf16[36,128], index: 1, kind: input, shape index: {}]
  %s2 = inlined_call_operand.vmem [shape: f32[16,128], index: 2, kind: output, shape index: {}]
  %s3 = sld [smem:[#allocation0]]
  $region41: #{conv2d_bn_relu.2} parent=0
    _
  %s5 = ssub.s32 1, %s3
  %s6 = scalar_select 0, %s5, %s3
  loop: start=0, step=1, limit=4
  $region2: #{conv2d_bn_relu.2} parent=0 // loop_pre_header
    _
  $region3: #{conv2d_bn_relu.2} parent=0 // loop_header
    %s8 = sphi 0, %s12
    %p9 = scmp.ge.s32.totalorder %s8, 4
    %s18 = sphi 0, %s20
    %s21 = sphi 0, %s18
    %s22 = sphi 0, %s21
    %s38 = sphi 0, %s22
    %s42 = sphi 0, %s42
    %s44 = sphi 0, %s42
    %s45 = sphi 0, %s44
    %s59 = sphi 0, %s45
    %s65 = sphi 0, %s67
    %s68 = sphi 0, %s65
    %s69 = sphi 0, %s68
    %s85 = sphi 0, %s69
  $region4: #{conv2d_bn_relu.2} parent=0 // loop_header_branch
    %11 = sbr.rel (%p9) target = $region8
  $region5: #{conv2d_bn_relu.2} parent=0 // loop_body
    %s13 = ssub.s32 %s8, 1
    %s14 = ssub.s32 %s8, 2
    %s15 = sadd.s32 %s8, 1
    %s16 = ssub.s32 %s8, %s15
    %p17 = scmp.eq.s32.totalorder %s16, 0
    %s19 = sadd.s32 %s18, 1
    %s20 = scalar_select %p17, %s18, %s19
    %p23 = pneg %p17
    %p24 = scmp.eq.s32.totalorder %s8, 1
    %p25 = por %p23, %p24
    %p26 = scmp.ne.s32.totalorder %s18, %s21
    %p27 = scmp.eq.s32.totalorder %s8, 0
    %p28 = por %p26, %p27
    %p29 = scmp.ne.s32.totalorder %s18, %s21
    %p30 = scmp.eq.s32.totalorder %s13, 1
    %p31 = por %p29, %p30
    %p32 = scmp.ne.s32.totalorder %s21, %s22
    %p33 = scmp.eq.s32.totalorder %s13, 0
    %p34 = por %p32, %p33
    %p35 = scmp.ne.s32.totalorder %s21, %s22
    %p36 = scmp.eq.s32.totalorder %s14, 1
    %p37 = por %p35, %p36
    %p39 = scmp.ne.s32.totalorder %s22, %s38
    %p40 = scmp.eq.s32.totalorder %s14, 0
    %p41 = por %p39, %p40
    %s43 = sadd.s32 %s42, 1
    %p46 = scmp.eq.s32.totalorder %s8, 1
    %p47 = scmp.ne.s32.totalorder %s42, %s44
    %p48 = scmp.eq.s32.totalorder %s8, 0
    %p49 = por %p47, %p48
    %p50 = scmp.ne.s32.totalorder %s42, %s44
    %p51 = scmp.eq.s32.totalorder %s13, 1
    %p52 = por %p50, %p51
    %p53 = scmp.ne.s32.totalorder %s44, %s45
    %p54 = scmp.eq.s32.totalorder %s13, 0
    %p55 = por %p53, %p54
    %p56 = scmp.ne.s32.totalorder %s44, %s45
    %p57 = scmp.eq.s32.totalorder %s14, 1
    %p58 = por %p56, %p57
    %p60 = scmp.ne.s32.totalorder %s45, %s59
    %p61 = scmp.eq.s32.totalorder %s14, 0
    %p62 = por %p60, %p61
    %s63 = ssub.s32 %s8, %s15
    %p64 = scmp.eq.s32.totalorder %s63, 0
    %s66 = sadd.s32 %s65, 1
    %s67 = scalar_select %p64, %s65, %s66
    %p70 = pneg %p64
    %p71 = scmp.eq.s32.totalorder %s8, 1
    %p72 = por %p70, %p71
    %p73 = scmp.ne.s32.totalorder %s65, %s68
    %p74 = scmp.eq.s32.totalorder %s8, 0
    %p75 = por %p73, %p74
    %p76 = scmp.ne.s32.totalorder %s65, %s68
    %p77 = scmp.eq.s32.totalorder %s13, 1
    %p78 = por %p76, %p77
    %p79 = scmp.ne.s32.totalorder %s68, %s69
    %p80 = scmp.eq.s32.totalorder %s13, 0
    %p81 = por %p79, %p80
    %p82 = scmp.ne.s32.totalorder %s68, %s69
    %p83 = scmp.eq.s32.totalorder %s14, 1
    %p84 = por %p82, %p83
    %p86 = scmp.ne.s32.totalorder %s69, %s85
    %p87 = scmp.eq.s32.totalorder %s14, 0
    %p88 = por %p86, %p87
    %p89 = scmp.le.s32.totalorder 1, %s8
    %p90 = scmp.lt.s32.totalorder %s8, 3
    %p91 = pnand %p89, %p90
    %p92 = pneg %p91
    // Predicated region
    $region9: #{conv2d_bn_relu.2} parent=5 // pred_check
      _
    $region10: #{conv2d_bn_relu.2} parent=5 // pred_check_branch
      %94 = sbr.rel (%p91) target = $region12
    $region11: #{conv2d_bn_relu.2} parent=5 // pred_region
      %s95 = ssub.s32 %s8, 1
      // Predicated region
      $region13: #{conv2d_bn_relu.2} parent=11 // pred_check
        %p96 = pneg %p55
      $region14: #{conv2d_bn_relu.2} parent=11 // pred_check_branch
        %98 = sbr.rel (%p96) target = $region16
      $region15: #{conv2d_bn_relu.2} parent=11 // pred_region
        _
      $region16: #{conv2d_bn_relu.2} parent=11 // pred_fallthru
        _
    $region12: #{conv2d_bn_relu.2} parent=5 // pred_fallthru
      _
    %p99 = scmp.lt.s32.totalorder %s8, 2
    // Predicated region
    $region17: #{conv2d_bn_relu.2} parent=5 // pred_check
      %p100 = pneg %p99
    $region18: #{conv2d_bn_relu.2} parent=5 // pred_check_branch
      %102 = sbr.rel (%p100) target = $region20
    $region19: #{conv2d_bn_relu.2} parent=5 // pred_region
      // Predicated region
      $region21: #{conv2d_bn_relu.2} parent=19 // pred_check
        %p103 = pneg %p28
      $region22: #{conv2d_bn_relu.2} parent=19 // pred_check_branch
        %105 = sbr.rel (%p103) target = $region24
      $region23: #{conv2d_bn_relu.2} parent=19 // pred_region
        %s106 = smul.u32 26, %s8
        %p107 = scmp.lt.s32.totalorder %s106, 51
        %s108 = scalar_select %p107, %s106, 51
        %s109 = smul.addr %s108, 4
        %s110 = scalar_lea.vmem %s0, %s109
        %s111 = smul.u32 26, %s8
      $region24: #{conv2d_bn_relu.2} parent=19 // pred_fallthru
        _
    $region20: #{conv2d_bn_relu.2} parent=5 // pred_fallthru
      _
    %p112 = scmp.le.s32.totalorder 1, %s8
    %p113 = scmp.lt.s32.totalorder %s8, 3
    %p114 = pnand %p112, %p113
    %p115 = pneg %p114
    // Predicated region
    $region25: #{conv2d_bn_relu.2} parent=5 // pred_check
      _
    $region26: #{conv2d_bn_relu.2} parent=5 // pred_check_branch
      %117 = sbr.rel (%p114) target = $region28
    $region27: #{conv2d_bn_relu.2} parent=5 // pred_region
      %s118 = ssub.s32 %s8, 1
      %s119 = smul.u32 26, %s13
      %p120 = scmp.lt.s32.totalorder %s119, 51
      %s121 = scalar_select %p120, %s119, 51
      %s122 = smul.addr %s121, 4
      %s123 = scalar_lea.vmem %s0, %s122
      %p124 = pneg %p34
      %p125 = pneg %p31
      %p126 = pneg %p55
      %p127 = pneg %p52
      %p128 = pneg %p81
      %p129 = pneg %p78
      %p130 = scmp.lt.s32.totalorder %s13, 1
      %s131 = scalar_select %p130, %s13, 1
      %s132 = smul.addr %s131, 8
      %s133 = scalar_lea.vmem %s2, %s132
      %s134 = smul.u32 26, %s13
      %p135 = scmp.lt.s32.totalorder %s134, 51
      %s136 = scalar_select %p135, %s134, 51
      %s137 = smul.addr %s136, 4
      %s138 = scalar_lea.vmem %s0, %s137
      %s139 = smul.u32 26, %s13
      %p140 = scmp.lt.s32.totalorder %s13, 1
      %s141 = scalar_select %p140, %s13, 1
      %s142 = smul.addr %s141, 8
      %s143 = scalar_lea.vmem %s2, %s142
      %v145 = vld [vmem:[%s138] sm:$0xf]
      %v146 = vld [vmem:[%s138 + $0x4] sm:$0xf]
      %v147 = vld [vmem:[%s138 + $0x8] sm:$0xf]
      %v148 = vld [vmem:[%s138 + $0xc] sm:$0xf]
      %v149 = vld [vmem:[%s138 + $0x10] sm:$0xf]
      %v150 = vld [vmem:[%s138 + $0x14] sm:$0xf]
      %v151 = vld [vmem:[%s138 + $0x18] sm:$0xf]
      %v152 = vld [vmem:[%s138 + $0x1c] sm:$0xf]
      %v153 = vld [vmem:[%s138 + $0x20] sm:$0xf]
      %v154 = vld [vmem:[%s138 + $0x24] sm:$0xf]
      %v155 = vld [vmem:[%s138 + $0x28] sm:$0xf]
      %v156 = vld [vmem:[%s138 + $0x2c] sm:$0xf]
      %v157 = vld [vmem:[%s138 + $0x30] sm:$0xf]
      %v158 = vld [vmem:[%s138 + $0x34] sm:$0xf]
      %v159 = vld [vmem:[%s138 + $0x38] sm:$0xf]
      %v160 = vld [vmem:[%s138 + $0x3c] sm:$0xf]
      %v161 = vld [vmem:[%s138 + $0x40] sm:$0xf]
      %v162 = vld [vmem:[%s138 + $0x44] sm:$0xf]
      %v163 = vld [vmem:[%s138 + $0x48] sm:$0xf]
      %v164 = vld [vmem:[%s138 + $0x4c] sm:$0xf]
      %v165 = vld [vmem:[%s138 + $0x50] sm:$0xf]
      %v166 = vld [vmem:[%s138 + $0x54] sm:$0xf]
      %v167 = vld [vmem:[%s138 + $0x58] sm:$0xf]
      %v168 = vld [vmem:[%s138 + $0x5c] sm:$0xf]
      %v169 = vld [vmem:[%s138 + $0x60] sm:$0xf]
      %v170 = vld [vmem:[%s138 + $0x64] sm:$0xf]
      %v171 = vld [vmem:[%s1] sm:$0xf]
      %v172 = vld [vmem:[%s1 + $0x4] sm:$0xf]
      %v173 = vld [vmem:[%s1 + $0x8] sm:$0xf]
      %v174 = vld [vmem:[%s1 + $0xc] sm:$0xf]
      %v175 = vld [vmem:[%s1 + $0x10] sm:$0x3]
      %v202 = vunpack.c.l.b16 %v145
      %v203 = vunpack.c.l.b16 %v146
      %v204 = vunpack.c.l.b16 %v147
      %v205 = vunpack.c.l.b16 %v148
      %v206 = vunpack.c.l.b16 %v149
      %v207 = vunpack.c.l.b16 %v150
      %v208 = vunpack.c.l.b16 %v151
      %v209 = vunpack.c.l.b16 %v152
      %v210 = vunpack.c.l.b16 %v153
      %v211 = vunpack.c.l.b16 %v154
      %v212 = vunpack.c.l.b16 %v155
      %v213 = vunpack.c.l.b16 %v156
      %v214 = vunpack.c.l.b16 %v157
      %v215 = vunpack.c.l.b16 %v158
      %v216 = vunpack.c.l.b16 %v159
      %v217 = vunpack.c.l.b16 %v160
      %v218 = vunpack.c.l.b16 %v161
      %v219 = vunpack.c.l.b16 %v162
      %v220 = vunpack.c.l.b16 %v163
      %v221 = vunpack.c.l.b16 %v164
      %v222 = vunpack.c.l.b16 %v165
      %v223 = vunpack.c.l.b16 %v166
      %v224 = vunpack.c.l.b16 %v167
      %v225 = vunpack.c.l.b16 %v168
      %v226 = vunpack.c.l.b16 %v169
      %v227 = vunpack.c.l.b16 %v170
      %v228 = vpack.c.b16 %v203, %v202
      %v229 = vpack.c.b16 %v205, %v204
      %v230 = vpack.c.b16 %v207, %v206
      %v231 = vpack.c.b16 %v209, %v208
      %v232 = vpack.c.b16 %v211, %v210
      %v233 = vpack.c.b16 %v213, %v212
      %v234 = vpack.c.b16 %v215, %v214
      %v235 = vpack.c.b16 %v217, %v216
      %v236 = vpack.c.b16 %v219, %v218
      %v237 = vpack.c.b16 %v221, %v220
      %v238 = vpack.c.b16 %v223, %v222
      %v239 = vpack.c.b16 %v225, %v224
      %v240 = vpack.c.b16 %v227, %v226
      %v246 = vunpack.c.l.b16 %v171
      %v247 = vunpack.c.l.b16 %v172
      %v248 = vunpack.c.l.b16 %v173
      %v249 = vunpack.c.l.b16 %v174
      %v250 = vunpack.c.l.b16 %v175
      %v251 = vpack.c.b16 %v247, %v246
      %v252 = vpack.c.b16 %v249, %v248
      %v253 = vpack.c.b16 %v250, %v250
      %vm256 = vcmask 293888
      %v258 = vsel %vm256, %v228, 0
      %v261 = vsel %vm256, %v229, 0
      %v264 = vsel %vm256, %v230, 0
      %v267 = vsel %vm256, %v231, 0
      %v270 = vsel %vm256, %v232, 0
      %v273 = vsel %vm256, %v233, 0
      %v276 = vsel %vm256, %v234, 0
      %v279 = vsel %vm256, %v235, 0
      %v282 = vsel %vm256, %v236, 0
      %v285 = vsel %vm256, %v237, 0
      %v288 = vsel %vm256, %v238, 0
      %v291 = vsel %vm256, %v239, 0
      %v294 = vsel %vm256, %v240, 0
      %vm296 = vcmask 1041408
      %v298 = vsel %vm296, %v253, 0
      %300 = vmatprep.subr.bf16.mxu0 0
      %301 = vmatpush1.bf16.msra.mxu0 0
      %302 = vmatprep.subr.bf16.mxu0 0
      %303 = vmatpush1.bf16.msra.mxu0 0
      %304 = vmatprep.subr.bf16.mxu0 0
      %305 = vmatpush1.bf16.msra.mxu0 0
      %306 = vmatprep.subr.bf16.mxu0 0
      %307 = vmatpush1.bf16.msra.mxu0 0
      %308 = vmatprep.subr.bf16.mxu0 0
      %309 = vmatpush1.bf16.msra.mxu0 0
      %310 = vmatprep.subr.bf16.mxu0 0
      %311 = vmatpush1.bf16.msra.mxu0 %v298
      %312 = vmatprep.subr.bf16.mxu0 0
      %313 = vmatpush1.bf16.msra.mxu0 %v252
      %314 = vmatprep.subr.bf16.mxu0 0
      %315 = vmatpush1.bf16.msra.mxu0 %v251
      %316 = vmatprep.subr.bf16.mxu0 0
      %317 = vmatpush2.bf16.msra.mxu0 0
      %318 = vmatprep.subr.bf16.mxu0 0
      %319 = vmatpush2.bf16.msra.mxu0 0
      %320 = vmatprep.subr.bf16.mxu0 0
      %321 = vmatpush2.bf16.msra.mxu0 0
      %322 = vmatprep.subr.bf16.mxu0 0
      %323 = vmatpush2.bf16.msra.mxu0 0
      %324 = vmatprep.subr.bf16.mxu0 0
      %325 = vmatpush2.bf16.msra.mxu0 0
      %326 = vmatprep.subr.bf16.mxu0 0
      %327 = vmatpush2.bf16.msra.mxu0 0
      %328 = vmatprep.subr.bf16.mxu0 0
      %329 = vmatpush2.bf16.msra.mxu0 0
      %330 = vmatprep.subr.bf16.mxu0 0
      %331 = vmatpush2.bf16.msra.mxu0 0
      %332 = vmatprep.mubr.bf16.mxu0 0
      %333 = vmatmul.mubr.bf16.gmra.mxu0 %v258
      %v334 = vpop.f32.mrf.mxu0
      %v335 = vadd.f32 0.0, %v334
      %v336 = vpop.f32.mrf.mxu0
      %v337 = vpop.f32.mrf.mxu0
      %v338 = vadd.f32 0.0, %v337
      %v339 = vpop.f32.mrf.mxu0
      %340 = vmatprep.mubr.bf16.mxu0 0
      %341 = vmatmul.mubr.bf16.gmra.mxu0 %v261
      %v342 = vpop.f32.mrf.mxu0
      %v343 = vadd.f32 0.0, %v342
      %v344 = vpop.f32.mrf.mxu0
      %v345 = vpop.f32.mrf.mxu0
      %v346 = vadd.f32 0.0, %v345
      %v347 = vpop.f32.mrf.mxu0
      %348 = vmatprep.mubr.bf16.mxu0 0
      %349 = vmatmul.mubr.bf16.gmra.mxu0 %v264
      %v350 = vpop.f32.mrf.mxu0
      %v351 = vadd.f32 0.0, %v350
      %v352 = vpop.f32.mrf.mxu0
      %v353 = vpop.f32.mrf.mxu0
      %v354 = vadd.f32 0.0, %v353
      %v355 = vpop.f32.mrf.mxu0
      %356 = vmatprep.mubr.bf16.mxu0 0
      %357 = vmatmul.mubr.bf16.gmra.mxu0 %v267
      %v358 = vpop.f32.mrf.mxu0
      %v359 = vadd.f32 0.0, %v358
      %v360 = vpop.f32.mrf.mxu0
      %v361 = vpop.f32.mrf.mxu0
      %v362 = vadd.f32 0.0, %v361
      %v363 = vpop.f32.mrf.mxu0
      %364 = vmatprep.mubr.bf16.mxu0 0
      %365 = vmatmul.mubr.bf16.gmra.mxu0 %v270
      %v366 = vpop.f32.mrf.mxu0
      %v367 = vadd.f32 0.0, %v366
      %v368 = vpop.f32.mrf.mxu0
      %v369 = vpop.f32.mrf.mxu0
      %v370 = vadd.f32 0.0, %v369
      %v371 = vpop.f32.mrf.mxu0
      %372 = vmatprep.mubr.bf16.mxu0 0
      %373 = vmatmul.mubr.bf16.gmra.mxu0 %v273
      %v374 = vpop.f32.mrf.mxu0
      %v375 = vadd.f32 0.0, %v374
      %v376 = vpop.f32.mrf.mxu0
      %v377 = vpop.f32.mrf.mxu0
      %v378 = vadd.f32 0.0, %v377
      %v379 = vpop.f32.mrf.mxu0
      %380 = vmatprep.mubr.bf16.mxu0 0
      %381 = vmatmul.mubr.bf16.gmra.mxu0 %v276
      %v382 = vpop.f32.mrf.mxu0
      %v383 = vadd.f32 0.0, %v382
      %v384 = vpop.f32.mrf.mxu0
      %v385 = vpop.f32.mrf.mxu0
      %v386 = vadd.f32 0.0, %v385
      %v387 = vpop.f32.mrf.mxu0
      %388 = vmatprep.mubr.bf16.mxu0 0
      %389 = vmatmul.mubr.bf16.gmra.mxu0 %v279
      %v390 = vpop.f32.mrf.mxu0
      %v391 = vadd.f32 0.0, %v390
      %v392 = vpop.f32.mrf.mxu0
      %v393 = vpop.f32.mrf.mxu0
      %v394 = vadd.f32 0.0, %v393
      %v395 = vpop.f32.mrf.mxu0
      %396 = vmatprep.mubr.bf16.mxu0 0
      %397 = vmatmul.mubr.bf16.gmra.mxu0 %v282
      %v398 = vpop.f32.mrf.mxu0
      %v399 = vadd.f32 0.0, %v398
      %v400 = vpop.f32.mrf.mxu0
      %v401 = vpop.f32.mrf.mxu0
      %v402 = vadd.f32 0.0, %v401
      %v403 = vpop.f32.mrf.mxu0
      %404 = vmatprep.mubr.bf16.mxu0 0
      %405 = vmatmul.mubr.bf16.gmra.mxu0 %v285
      %v406 = vpop.f32.mrf.mxu0
      %v407 = vadd.f32 0.0, %v406
      %v408 = vpop.f32.mrf.mxu0
      %v409 = vpop.f32.mrf.mxu0
      %v410 = vadd.f32 0.0, %v409
      %v411 = vpop.f32.mrf.mxu0
      %412 = vmatprep.mubr.bf16.mxu0 0
      %413 = vmatmul.mubr.bf16.gmra.mxu0 %v288
      %v414 = vpop.f32.mrf.mxu0
      %v415 = vadd.f32 0.0, %v414
      %v416 = vpop.f32.mrf.mxu0
      %v417 = vpop.f32.mrf.mxu0
      %v418 = vadd.f32 0.0, %v417
      %v419 = vpop.f32.mrf.mxu0
      %420 = vmatprep.mubr.bf16.mxu0 0
      %421 = vmatmul.mubr.bf16.gmra.mxu0 %v291
      %v422 = vpop.f32.mrf.mxu0
      %v423 = vadd.f32 0.0, %v422
      %v424 = vpop.f32.mrf.mxu0
      %v425 = vpop.f32.mrf.mxu0
      %v426 = vadd.f32 0.0, %v425
      %v427 = vpop.f32.mrf.mxu0
      %428 = vmatprep.mubr.bf16.mxu0 0
      %429 = vmatmul.mubr.bf16.gmra.mxu0 %v294
      %v430 = vpop.f32.mrf.mxu0
      %v431 = vadd.f32 0.0, %v430
      %v432 = vpop.f32.mrf.mxu0
      %v433 = vpop.f32.mrf.mxu0
      %v434 = vadd.f32 0.0, %v433
      %v435 = vpop.f32.mrf.mxu0
      %436 = vdwg.mxu0
      %v437 = vadd.f32 %v335, %v338
      %v438 = vadd.f32 %v437, %v343
      %v439 = vadd.f32 %v438, %v346
      %v440 = vadd.f32 %v439, %v351
      %v441 = vadd.f32 %v440, %v354
      %v442 = vadd.f32 %v441, %v359
      %v443 = vadd.f32 %v442, %v362
      %v444 = vadd.f32 %v443, %v367
      %v445 = vadd.f32 %v444, %v370
      %v446 = vadd.f32 %v445, %v375
      %v447 = vadd.f32 %v446, %v378
      %v448 = vadd.f32 %v447, %v383
      %v449 = vadd.f32 %v448, %v386
      %v450 = vadd.f32 %v449, %v391
      %v451 = vadd.f32 %v450, %v394
      %v452 = vadd.f32 %v451, %v399
      %v453 = vadd.f32 %v452, %v402
      %v454 = vadd.f32 %v453, %v407
      %v455 = vadd.f32 %v454, %v410
      %v456 = vadd.f32 %v455, %v415
      %v457 = vadd.f32 %v456, %v418
      %v458 = vadd.f32 %v457, %v423
      %v459 = vadd.f32 %v458, %v426
      %v460 = vadd.f32 %v459, %v431
      %v461 = vadd.f32 %v460, %v434
      %v462 = vrot.slane %v461, 4
      %v463 = vadd.f32 %v461, %v462
      %v464 = vrot.slane %v463, 2
      %v465 = vadd.f32 %v463, %v464
      %v466 = vrot.slane %v465, 1
      %v467 = vadd.f32 %v465, %v466
      %468 = vst [vmem:[%s143] sm:$0x1] %v467
      %v469 = vmul.f32 %v335, %v335
      %v470 = vmul.f32 %v338, %v338
      %v471 = vmul.f32 %v343, %v343
      %v472 = vmul.f32 %v346, %v346
      %v473 = vmul.f32 %v351, %v351
      %v474 = vmul.f32 %v354, %v354
      %v475 = vmul.f32 %v359, %v359
      %v476 = vmul.f32 %v362, %v362
      %v477 = vmul.f32 %v367, %v367
      %v478 = vmul.f32 %v370, %v370
      %v479 = vmul.f32 %v375, %v375
      %v480 = vmul.f32 %v378, %v378
      %v481 = vmul.f32 %v383, %v383
      %v482 = vmul.f32 %v386, %v386
      %v483 = vmul.f32 %v391, %v391
      %v484 = vmul.f32 %v394, %v394
      %v485 = vmul.f32 %v399, %v399
      %v486 = vmul.f32 %v402, %v402
      %v487 = vmul.f32 %v407, %v407
      %v488 = vmul.f32 %v410, %v410
      %v489 = vmul.f32 %v415, %v415
      %v490 = vmul.f32 %v418, %v418
      %v491 = vmul.f32 %v423, %v423
      %v492 = vmul.f32 %v426, %v426
      %v493 = vmul.f32 %v431, %v431
      %v494 = vmul.f32 %v434, %v434
      %v495 = vadd.f32 %v469, %v470
      %v496 = vadd.f32 %v495, %v471
      %v497 = vadd.f32 %v496, %v472
      %v498 = vadd.f32 %v497, %v473
      %v499 = vadd.f32 %v498, %v474
      %v500 = vadd.f32 %v499, %v475
      %v501 = vadd.f32 %v500, %v476
      %v502 = vadd.f32 %v501, %v477
      %v503 = vadd.f32 %v502, %v478
      %v504 = vadd.f32 %v503, %v479
      %v505 = vadd.f32 %v504, %v480
      %v506 = vadd.f32 %v505, %v481
      %v507 = vadd.f32 %v506, %v482
      %v508 = vadd.f32 %v507, %v483
      %v509 = vadd.f32 %v508, %v484
      %v510 = vadd.f32 %v509, %v485
      %v511 = vadd.f32 %v510, %v486
      %v512 = vadd.f32 %v511, %v487
      %v513 = vadd.f32 %v512, %v488
      %v514 = vadd.f32 %v513, %v489
      %v515 = vadd.f32 %v514, %v490
      %v516 = vadd.f32 %v515, %v491
      %v517 = vadd.f32 %v516, %v492
      %v518 = vadd.f32 %v517, %v493
      %v519 = vadd.f32 %v518, %v494
      %v520 = vrot.slane %v519, 4
      %v521 = vadd.f32 %v519, %v520
      %v522 = vrot.slane %v521, 2
      %v523 = vadd.f32 %v521, %v522
      %v524 = vrot.slane %v523, 1
      %v525 = vadd.f32 %v523, %v524
      %526 = vst [vmem:[%s143 + $0x1] sm:$0x1] %v525
      %p527 = scmp.lt.s32.totalorder %s13, 1
      %s528 = scalar_select %p527, %s13, 1
      %s529 = smul.addr %s528, 8
      %s530 = scalar_lea.vmem %s2, %s529
      // Predicated region
      $region29: #{conv2d_bn_relu.2} parent=27 // pred_check
        %p531 = pneg %p78
      $region30: #{conv2d_bn_relu.2} parent=27 // pred_check_branch
        %533 = sbr.rel (%p531) target = $region32
      $region31: #{conv2d_bn_relu.2} parent=27 // pred_region
        _
      $region32: #{conv2d_bn_relu.2} parent=27 // pred_fallthru
        _
    $region28: #{conv2d_bn_relu.2} parent=5 // pred_fallthru
      _
    %p534 = scmp.le.s32.totalorder 2, %s8
    // Predicated region
    $region33: #{conv2d_bn_relu.2} parent=5 // pred_check
      %p535 = pneg %p534
    $region34: #{conv2d_bn_relu.2} parent=5 // pred_check_branch
      %537 = sbr.rel (%p535) target = $region36
    $region35: #{conv2d_bn_relu.2} parent=5 // pred_region
      %s538 = ssub.s32 %s8, 2
      // Predicated region
      $region37: #{conv2d_bn_relu.2} parent=35 // pred_check
        %p539 = pneg %p84
      $region38: #{conv2d_bn_relu.2} parent=35 // pred_check_branch
        %541 = sbr.rel (%p539) target = $region40
      $region39: #{conv2d_bn_relu.2} parent=35 // pred_region
        %p542 = scmp.lt.s32.totalorder %s14, 1
        %s543 = scalar_select %p542, %s14, 1
        %s544 = smul.addr %s543, 8
        %s545 = scalar_lea.vmem %s2, %s544
      $region40: #{conv2d_bn_relu.2} parent=35 // pred_fallthru
        _
    $region36: #{conv2d_bn_relu.2} parent=5 // pred_fallthru
      _
  $region6: #{conv2d_bn_relu.2} parent=0 // loop_footer
    %s12 = sadd.s32 1, %s8
  $region7: #{conv2d_bn_relu.2} parent=0 // loop_footer_branch
    %7 = sbr.rel target = $region3
  $region8: #{conv2d_bn_relu.2} parent=0 // loop_exit
    _

</llo_original>
